<compile_context>
chip_gen: v7x
topology: tpu7x:2x2x1
jax: 0.10.0
libtpu: 0.0.40
codegen_flags: <defaults>
</compile_context>

<pallas_src>
import functools

import jax
import jax.numpy as jnp
from jax.experimental import pallas as pl
from jax.experimental.pallas import tpu as pltpu


def _make_kernel(approx_softmax):
    def mixture_head_kernel(x_ref, w_ref, b_ref, out_ref):
        # x_ref:   (TB, D)   context tile, original dtype (e.g. f32)
        # w_ref:   (D, 3K)   transposed linear weight, MXU dtype (grid-invariant)
        # b_ref:   (1, 3K)   bias (grid-invariant)
        # out_ref: (TB, 3K)  fused [means | stds | weights] slab
        k = out_ref.shape[-1] // 3

        # In-kernel cast to the MXU dtype (bf16): x stays f32 in HBM and is
        # read exactly once; the cast rides in spare VPU slots.
        x = x_ref[...].astype(w_ref.dtype)
        w = w_ref[...]
        b = b_ref[...].astype(jnp.float32)

        # Linear layer on the MXU, f32 accumulation.
        out = jnp.dot(x, w, preferred_element_type=jnp.float32) + b  # (TB, 3K)

        # Lane-group masks over the fused tile: lanes [0,K) = means,
        # [K,2K) = log_stds, [2K,3K) = logits.  Masked VPU selects keep
        # everything in the same vregs (no unaligned slices / concat).
        lane = jax.lax.broadcasted_iota(jnp.int32, out.shape, 1)
        is_std = (lane >= k) & (lane < 2 * k)
        is_logit = lane >= 2 * k

        # Numerically stable softmax restricted to the logit lanes.
        logits = jnp.where(is_logit, out, -jnp.inf)
        m = jnp.max(logits, axis=-1, keepdims=True)
        e = jnp.exp(logits - m)                        # non-logit lanes -> 0
        denom = jnp.sum(e, axis=-1, keepdims=True)     # sums only logit lanes
        if approx_softmax:
            weights = e * pl.reciprocal(denom, approx=True)  # EUP slot, ~free
        else:
            weights = e / denom

        # stds = exp(log_stds) on the std lanes (EUP).
        stds = jnp.exp(jnp.where(is_std, out, 0.0))

        result = jnp.where(is_std, stds, out)          # std lanes -> exp
        result = jnp.where(is_logit, weights, result)  # logit lanes -> softmax
        out_ref[...] = result.astype(out_ref.dtype)    # one fused writeback

    return mixture_head_kernel


def _device_kind():
    try:
        return jax.devices()[0].device_kind.lower()
    except Exception:
        return ""


def _vmem_capacity_bytes():
    try:
        return int(pltpu.get_tpu_info().vmem_capacity_bytes)
    except Exception:
        return 64 * 2 ** 20  # conservative (v7x per-TC)


def _pick_block_b(batch, d, in_bytes, block_b):
    """Batch tile: ~2 MiB of x per buffer, multiple of 16 rows, <= batch."""
    if block_b is None:
        target = (2 * 1024 * 1024) // max(1, d * in_bytes)
        tb = max(256, (target // 16) * 16)
    else:
        tb = block_b
    tb = min(tb, batch)
    if tb < batch:
        tb = max(16, (tb // 16) * 16)
        tb = min(tb, batch)
    return max(1, tb)


def _make_x_spec(tb, d):
    """x BlockSpec; on v5e request a 3-deep input pipeline (tiny tiles)."""
    idx = lambda i: (i, 0)
    kind = _device_kind()
    if ("v5e" in kind) or ("v5 lite" in kind) or ("v5litepod" in kind):
        try:
            return pl.BlockSpec((tb, d), idx, pipeline_mode=pl.Buffered(3))
        except TypeError:
            pass
    return pl.BlockSpec((tb, d), idx)


def _batch_semantics(num_steps):
    """On v7x shard the batch grid axis across the 2 TensorCores."""
    kind = _device_kind()
    if num_steps >= 2 and ("v7" in kind or "7x" in kind):
        return (pltpu.CORE_PARALLEL,)
    return ("parallel",)


@functools.partial(
    jax.jit,
    static_argnames=("num_components", "block_b", "compute_dtype",
                     "out_dtype", "approx_softmax"))
def mixture_head(context, w_t, b, *, num_components, block_b=None,
                 compute_dtype=jnp.bfloat16, out_dtype=None,
                 approx_softmax=True):
    """context: (B, D); w_t: (D, 3K) (transposed nn.Linear weight); b: (1, 3K)."""
    B, D = context.shape
    K = num_components
    assert w_t.shape == (D, 3 * K)
    assert b.shape == (1, 3 * K)

    out_dtype = context.dtype if out_dtype is None else out_dtype

    # Only the tiny weight is pre-cast; context stays in its HBM dtype and is
    # cast on the VPU inside the kernel (no extra HBM round-trip).
    if compute_dtype is not None:
        w_t = w_t.astype(compute_dtype)
    b = b.astype(jnp.float32)

    in_bytes = jnp.dtype(context.dtype).itemsize
    w_bytes = jnp.dtype(w_t.dtype).itemsize
    out_bytes = jnp.dtype(out_dtype).itemsize

    tb = _pick_block_b(B, D, in_bytes, block_b)
    num_steps = pl.cdiv(B, tb)
    grid = (num_steps,)

    # Double-buffered x tile + output tile, resident w / b (count 2x to be safe).
    vmem_est = (2 * tb * D * in_bytes
                + 2 * tb * 3 * K * out_bytes
                + 2 * D * 3 * K * w_bytes
                + 2 * 3 * K * 4)
    vmem_cap = _vmem_capacity_bytes()
    headroom = 16 * 2 ** 20
    vmem_limit = int(min(max(32 * 2 ** 20, 4 * vmem_est),
                         max(16 * 2 ** 20, vmem_cap - headroom)))
    vmem_limit = max(vmem_limit, 2 * vmem_est + (1 << 20))
    vmem_limit = min(vmem_limit, vmem_cap)

    cost = pl.CostEstimate(
        flops=2 * B * D * 3 * K,
        transcendentals=2 * B * K + B,
        bytes_accessed=(B * D * in_bytes + D * 3 * K * w_bytes
                        + 3 * K * 4 + B * 3 * K * out_bytes),
    )

    slab = pl.pallas_call(
        _make_kernel(approx_softmax),
        out_shape=jax.ShapeDtypeStruct((B, 3 * K), out_dtype),
        grid_spec=pltpu.PrefetchScalarGridSpec(
            num_scalar_prefetch=0,
            grid=grid,
            in_specs=[
                _make_x_spec(tb, D),                          # x: tiled over batch
                pl.BlockSpec((D, 3 * K), lambda i: (0, 0)),   # w: grid-invariant
                pl.BlockSpec((1, 3 * K), lambda i: (0, 0)),   # b: grid-invariant
            ],
            out_specs=pl.BlockSpec((tb, 3 * K), lambda i: (i, 0)),
        ),
        compiler_params=pltpu.CompilerParams(
            dimension_semantics=_batch_semantics(num_steps),
            vmem_limit_bytes=vmem_limit,
        ),
        cost_estimate=cost,
    )(context, w_t, b)

    means = slab[:, 0 * K:1 * K]
    stds = slab[:, 1 * K:2 * K]
    weights = slab[:, 2 * K:3 * K]
    return means, stds, weights


def _reference(context, w_t, b, num_components, compute_dtype=jnp.bfloat16):
    """Mirrors the kernel math (bf16 MXU operands, f32 accumulation/exp)."""
    x, w = context, w_t
    if compute_dtype is not None:
        x = x.astype(compute_dtype)
        w = w.astype(compute_dtype)
    out = jnp.dot(x, w, preferred_element_type=jnp.float32) + b.astype(jnp.float32)
    K = num_components
    means = out[:, :K]
    stds = jnp.exp(out[:, K:2 * K])
    weights = jax.nn.softmax(out[:, 2 * K:3 * K], axis=-1)
    dt = context.dtype
    return means.astype(dt), stds.astype(dt), weights.astype(dt)


if __name__ == "__main__":
    def run_case(B, D, K, block_b):
        key = jax.random.PRNGKey(0)
        k_x, k_w, k_b = jax.random.split(key, 3)

        context = jax.random.normal(k_x, (B, D), dtype=jnp.float32)

        # Deterministic "Linear(emb_dim, 3K)" params (PyTorch weight is (3K, D);
        # the kernel takes its transpose (D, 3K)).
        bound = 1.0 / jnp.sqrt(D)
        w = jax.random.uniform(k_w, (3 * K, D), dtype=jnp.float32,
                               minval=-bound, maxval=bound)
        b = jax.random.uniform(k_b, (1, 3 * K), dtype=jnp.float32,
                               minval=-bound, maxval=bound)
        w_t = w.T

        means, stds, weights = mixture_head(context, w_t, b,
                                            num_components=K, block_b=block_b)
        jax.block_until_ready((means, stds, weights))

        r_means, r_stds, r_weights = _reference(context, w_t, b, K)
        assert jnp.allclose(means, r_means, atol=1e-3, rtol=1e-3), "means mismatch"
        assert jnp.allclose(stds, r_stds, atol=1e-3, rtol=1e-3), "stds mismatch"
        # approx reciprocal in softmax -> slightly looser tolerance on weights
        assert jnp.allclose(weights, r_weights, atol=5e-3, rtol=5e-3), "weights mismatch"
        # weights should (approximately) normalize
        assert jnp.allclose(jnp.sum(weights, axis=-1), 1.0, atol=5e-3), "weights not normalized"

    # Original toy shape (single grid step, full-extent blocks).
    run_case(B=8, D=32, K=3, block_b=None)
    # Tiled batch: 2-step grid exercises the double-buffered / parallel path.
    run_case(B=256, D=32, K=3, block_b=128)

    print("KERNEL_OK")
</pallas_src>

<mosaic_0001>
module attributes {stable_mosaic.version = 11 : i64} {
  func.func @mixture_head_kernel(%arg0: i32, %arg1: memref<8x32xf32, #tpu.memory_space<vmem>>, %arg2: memref<32x9xbf16, #tpu.memory_space<vmem>>, %arg3: memref<1x9xf32, #tpu.memory_space<vmem>>, %arg4: memref<8x9xf32, #tpu.memory_space<vmem>>) attributes {dimension_semantics = [#tpu.dimension_semantics<parallel>], iteration_bounds = array<i64: 1>, scalar_prefetch = 0 : i64, scratch_operands = 0 : i64, tpu.core_type = #tpu.core_type<tc>, window_params = [{transform_indices = @transform_0, window_bounds = array<i64: 8, 32>}, {pipeline_mode = #tpu.pipeline_mode<synchronous>, transform_indices = @transform_1, window_bounds = array<i64: 32, 9>}, {pipeline_mode = #tpu.pipeline_mode<synchronous>, transform_indices = @transform_2, window_bounds = array<i64: 1, 9>}, {transform_indices = @transform_3, window_bounds = array<i64: 8, 9>}]} {
    %c0 = arith.constant 0 : index
    %c0_0 = arith.constant 0 : index
    %0 = vector.load %arg1[%c0, %c0_0] : memref<8x32xf32, #tpu.memory_space<vmem>>, vector<8x32xf32>
    %1 = arith.truncf %0 : vector<8x32xf32> to vector<8x32xbf16>
    %c0_1 = arith.constant 0 : index
    %c0_2 = arith.constant 0 : index
    %2 = vector.load %arg2[%c0_1, %c0_2] : memref<32x9xbf16, #tpu.memory_space<vmem>>, vector<32x9xbf16>
    %c0_3 = arith.constant 0 : index
    %c0_4 = arith.constant 0 : index
    %3 = vector.load %arg3[%c0_3, %c0_4] : memref<1x9xf32, #tpu.memory_space<vmem>>, vector<1x9xf32>
    %cst = arith.constant dense<0.000000e+00> : vector<8x9xf32>
    %4 = tpu.matmul %1, %2, %cst {dimension_numbers = #tpu.dot_dimension_numbers<[1], [0], [0], [1], [0, 0, 1, 1], [], []>} : vector<8x32xbf16>, vector<32x9xbf16>, vector<8x9xf32> -> vector<8x9xf32>
    %5 = vector.broadcast %3 : vector<1x9xf32> to vector<8x9xf32>
    %6 = arith.addf %4, %5 : vector<8x9xf32>
    %7 = tpu.iota {dimensions = array<i32: 1>} : vector<8x9xi32>
    %c3_i32 = arith.constant 3 : i32
    %8 = vector.broadcast %c3_i32 : i32 to vector<8x9xi32>
    %9 = arith.cmpi sge, %7, %8 : vector<8x9xi32>
    %c6_i32 = arith.constant 6 : i32
    %10 = vector.broadcast %c6_i32 : i32 to vector<8x9xi32>
    %11 = arith.cmpi slt, %7, %10 : vector<8x9xi32>
    %12 = arith.andi %9, %11 : vector<8x9xi1>
    %c6_i32_5 = arith.constant 6 : i32
    %13 = vector.broadcast %c6_i32_5 : i32 to vector<8x9xi32>
    %14 = arith.cmpi sge, %7, %13 : vector<8x9xi32>
    %cst_6 = arith.constant 0xFF800000 : f32
    %15 = vector.broadcast %cst_6 : f32 to vector<8x9xf32>
    %16 = arith.select %14, %6, %15 : vector<8x9xi1>, vector<8x9xf32>
    %cst_7 = arith.constant dense<0xFF800000> : vector<8xf32>
    %17 = vector.multi_reduction <maximumf>, %16, %cst_7 [1] : vector<8x9xf32> to vector<8xf32>
    %18 = vector.shape_cast %17 : vector<8xf32> to vector<8x1xf32>
    %19 = vector.broadcast %18 : vector<8x1xf32> to vector<8x9xf32>
    %20 = arith.subf %16, %19 : vector<8x9xf32>
    %21 = math.exp %20 : vector<8x9xf32>
    %cst_8 = arith.constant dense<0.000000e+00> : vector<8xf32>
    %22 = vector.multi_reduction <add>, %21, %cst_8 [1] : vector<8x9xf32> to vector<8xf32>
    %23 = vector.shape_cast %22 : vector<8xf32> to vector<8x1xf32>
    %24 = tpu.reciprocal %23 {approx = true} : vector<8x1xf32> -> vector<8x1xf32>
    %25 = vector.broadcast %24 : vector<8x1xf32> to vector<8x9xf32>
    %26 = arith.mulf %21, %25 : vector<8x9xf32>
    %cst_9 = arith.constant 0.000000e+00 : f32
    %27 = vector.broadcast %cst_9 : f32 to vector<8x9xf32>
    %28 = arith.select %12, %6, %27 : vector<8x9xi1>, vector<8x9xf32>
    %29 = math.exp %28 : vector<8x9xf32>
    %30 = arith.select %12, %29, %6 : vector<8x9xi1>, vector<8x9xf32>
    %31 = arith.select %14, %26, %30 : vector<8x9xi1>, vector<8x9xf32>
    %c0_10 = arith.constant 0 : index
    %c0_11 = arith.constant 0 : index
    %32 = vector.load %arg4[%c0_10, %c0_11] : memref<8x9xf32, #tpu.memory_space<vmem>>, vector<8x9xf32>
    tpu.vector_store %arg4[%c0_10, %c0_11], %31 {strides = array<i32>} : memref<8x9xf32, #tpu.memory_space<vmem>>, vector<8x9xf32>,
    return
  }
  func.func @transform_0(%arg0: i32) -> (i32, i32) {
    %c0_i32 = arith.constant 0 : i32
    %c0_i32_0 = arith.constant 0 : i32
    return %arg0, %c0_i32 : i32, i32
  }
  func.func @transform_1(%arg0: i32) -> (i32, i32) {
    %c0_i32 = arith.constant 0 : i32
    %c0_i32_0 = arith.constant 0 : i32
    %c0_i32_1 = arith.constant 0 : i32
    return %c0_i32, %c0_i32_0 : i32, i32
  }
  func.func @transform_2(%arg0: i32) -> (i32, i32) {
    %c0_i32 = arith.constant 0 : i32
    %c0_i32_0 = arith.constant 0 : i32
    %c0_i32_1 = arith.constant 0 : i32
    return %c0_i32, %c0_i32_0 : i32, i32
  }
  func.func @transform_3(%arg0: i32) -> (i32, i32) {
    %c0_i32 = arith.constant 0 : i32
    %c0_i32_0 = arith.constant 0 : i32
    return %arg0, %c0_i32 : i32, i32
  }
}

</mosaic_0001>

<llo_original>
// kernel: mixture_head.1
$region0: #{mixture_head.1}
  #allocation0 [shape = 'u32[]', space=smem, size = 0x4, offset = 0x4, fixed_abs, tag = 'smem constant byte address 0x4 - core index']
  #allocation1 [shape = 'u32[144,128]{1,0:T(1,128)}', space=vmem, size = 0x12000, scoped, tag = 'internal scratch']
  %s0 = inlined_call_operand.vmem [shape: f32[8,32], index: 0, kind: input, shape index: {}]
  %s1 = inlined_call_operand.vmem [shape: bf16[32,9], index: 1, kind: input, shape index: {}]
  %s2 = inlined_call_operand.vmem [shape: f32[1,9], index: 2, kind: input, shape index: {}]
  %s3 = inlined_call_operand.vmem [shape: f32[8,9], index: 3, kind: output, shape index: {}]
  %s4 = sld [smem:[#allocation0]]
  $region22: #{mixture_head.1} parent=0
    _
  %s6 = ssub.s32 1, %s4
  %s7 = scalar_select 0, %s6, %s4
  // Predicated region
  $region2: #{mixture_head.1} parent=0 // pred_check
    _
  $region3: #{mixture_head.1} parent=0 // pred_check_branch
    %9 = sbr.rel (0) target = $region5
  $region4: #{mixture_head.1} parent=0 // pred_region
    _
  $region5: #{mixture_head.1} parent=0 // pred_fallthru
    _
  // Predicated region
  $region6: #{mixture_head.1} parent=0 // pred_check
    _
  $region7: #{mixture_head.1} parent=0 // pred_check_branch
    %11 = sbr.rel (0) target = $region9
  $region8: #{mixture_head.1} parent=0 // pred_region
    _
  $region9: #{mixture_head.1} parent=0 // pred_fallthru
    _
  // Predicated region
  $region10: #{mixture_head.1} parent=0 // pred_check
    _
  $region11: #{mixture_head.1} parent=0 // pred_check_branch
    %13 = sbr.rel (0) target = $region13
  $region12: #{mixture_head.1} parent=0 // pred_region
    _
  $region13: #{mixture_head.1} parent=0 // pred_fallthru
    _
  %v15 = vld [vmem:[%s0] sm:$0xff]
  %v16 = vpack.c.bf16 %v15, %v15
  %v17 = vld [vmem:[%s1] sm:$0xf]
  %v18 = vld [vmem:[%s1 + $0x4] sm:$0xf]
  %v19 = vld [vmem:[%s1 + $0x8] sm:$0xf]
  %v20 = vld [vmem:[%s1 + $0xc] sm:$0xf]
  %v21 = vld [vmem:[%s2] sm:$0x1]
  %v23 = vlaneseq
  %v24 = vshrl.u32 %v23, 7
  %v25 = vsub.s32 0, %v24
  %v26 = vrot.slane %v21, %v25
  %v32 = vunpack.c.l.b16 %v17
  %v33 = vunpack.c.l.b16 %v18
  %v34 = vunpack.c.l.b16 %v19
  %v35 = vunpack.c.l.b16 %v20
  %v36 = vpack.c.b16 %v33, %v32
  %v37 = vpack.c.b16 %v35, %v34
  %vm40 = vcmask 261120
  %v42 = vsel %vm40, %v16, 0
  %44 = vmatprep.subr.bf16.mxu0 0
  %45 = vmatpush1.bf16.msra.mxu0 %v36
  %46 = vmatprep.subr.bf16.mxu0 0
  %47 = vmatpush1.bf16.msra.mxu0 %v37
  %48 = vmatprep.subr.bf16.mxu0 0
  %49 = vmatpush1.bf16.msra.mxu0 0
  %50 = vmatprep.subr.bf16.mxu0 0
  %51 = vmatpush1.bf16.msra.mxu0 0
  %52 = vmatprep.subr.bf16.mxu0 0
  %53 = vmatpush1.bf16.msra.mxu0 0
  %54 = vmatprep.subr.bf16.mxu0 0
  %55 = vmatpush1.bf16.msra.mxu0 0
  %56 = vmatprep.subr.bf16.mxu0 0
  %57 = vmatpush1.bf16.msra.mxu0 0
  %58 = vmatprep.subr.bf16.mxu0 0
  %59 = vmatpush1.bf16.msra.mxu0 0
  %60 = vmatprep.subr.bf16.mxu0 0
  %61 = vmatpush1.bf16.msra.mxu0 0
  %62 = vmatprep.subr.bf16.mxu0 0
  %63 = vmatpush1.bf16.msra.mxu0 0
  %64 = vmatprep.subr.bf16.mxu0 0
  %65 = vmatpush1.bf16.msra.mxu0 0
  %66 = vmatprep.subr.bf16.mxu0 0
  %67 = vmatpush1.bf16.msra.mxu0 0
  %68 = vmatprep.subr.bf16.mxu0 0
  %69 = vmatpush1.bf16.msra.mxu0 0
  %70 = vmatprep.subr.bf16.mxu0 0
  %71 = vmatpush1.bf16.msra.mxu0 0
  %72 = vmatprep.subr.bf16.mxu0 0
  %73 = vmatpush1.bf16.msra.mxu0 0
  %74 = vmatprep.subr.bf16.mxu0 0
  %75 = vmatpush1.bf16.msra.mxu0 0
  %76 = vmatprep.mubr.bf16.mxu0 0
  %77 = vmatmul.mubr.bf16.gmra.mrb[0].mxu0 %v42
  %v78 = vpop.f32.mrb[0].mxu0
  %v79 = vadd.f32 %v26, %v78
  %v80 = vpop.f32.mrb[0].mxu0
  %v81 = vpop.f32.mrb[0].mxu0
  %v82 = vpop.f32.mrb[0].mxu0
  %83 = vdwg.mxu0
  %v84 = vlaneseq
  %v85 = vand.u32 %v84, 127
  %vm86 = vcmp.ge.s32.totalorder %v85, 3
  %vm87 = vcmp.lt.s32.totalorder %v85, 6
  %vm88 = vmand %vm86, %vm87
  %vm89 = vcmp.ge.s32.totalorder %v85, 6
  %v90 = vsel %vm89, %v79, -inf
  %vm91 = vcmask 72704
  %v92 = vsel %vm91, %v90, -inf
  %93 = vmax.xlane.f32.xlu0 %v92
  %v94 = vpop.xlane.xlu0 %93
  %v95 = vsub.f32 %v90, %v94
  %v96 = vmul.f32 %v95, 1.442695
  %v97 = vpow.pop %v96
  %v98 = vsel %vm91, %v97, 0.0
  %99 = vadd.xlane.f32.xlu0 %v98
  %v100 = vpop.xlane.xlu0 %99
  %v101 = vrcp.pop %v100
  %v102 = vmul.f32 %v97, %v101
  %v103 = vsel %vm88, %v79, 0.0
  %v104 = vmul.f32 %v103, 1.442695
  %v105 = vpow.pop %v104
  %v106 = vsel %vm88, %v105, %v79
  %v107 = vsel %vm89, %v102, %v106
  %108 = vst.msk [vmem:[%s3] sm:$0xff] %vm91, %v107
  // Predicated region
  $region14: #{mixture_head.1} parent=0 // pred_check
    _
  $region15: #{mixture_head.1} parent=0 // pred_check_branch
    %110 = sbr.rel (0) target = $region17
  $region16: #{mixture_head.1} parent=0 // pred_region
    _
  $region17: #{mixture_head.1} parent=0 // pred_fallthru
    _
  // Predicated region
  $region18: #{mixture_head.1} parent=0 // pred_check
    _
  $region19: #{mixture_head.1} parent=0 // pred_check_branch
    %112 = sbr.rel (0) target = $region21
  $region20: #{mixture_head.1} parent=0 // pred_region
    _
  $region21: #{mixture_head.1} parent=0 // pred_fallthru
    _

</llo_original>
